<compile_context>
chip_gen: v6e
topology: v6e:2x2x1
jax: 0.10.0
libtpu: 0.0.40
codegen_flags: <defaults>
</compile_context>

<pallas_src>
import functools

import jax
import jax.numpy as jnp
from jax.experimental import pallas as pl
from jax.experimental.pallas import tpu as pltpu

LANES = 128  # vreg lane width; all H-sized dims are zero-padded to this.


def prepare_params(w_ih, w_hh, b_ih, b_hh, w_fc, b_fc):
    """One-time packing of all loop-invariant parameters into a single
    zero-padded f32 slab of shape (N_ROWS, 128).

    Row layout:
      [0,           LANES)         : W_hh^T zero-padded to (128, 128)
      [LANES,       LANES+1)       : b_ih + b_hh       (lanes 0..H-1)
      [LANES+1,     LANES+1+I)     : W_ih^T rows       (lanes 0..H-1)
      [LANES+1+I,   LANES+1+I+O)   : W_fc rows         (lanes 0..H-1)
      [LANES+1+I+O, LANES+2+I+O)   : b_fc              (lanes 0..O-1)

    Call once at parameter-init time and reuse the slab for every forward
    call: per-call weight prep and 5 separate tiny input DMAs collapse into
    a single parameter DMA.
    """
    H, I = w_ih.shape
    O = w_fc.shape[0]
    assert H <= LANES and O <= LANES and I <= LANES

    n_rows = LANES + 1 + I + O + 1
    n_rows = ((n_rows + 7) // 8) * 8  # sublane-align

    slab = jnp.zeros((n_rows, LANES), jnp.float32)
    slab = slab.at[:H, :H].set(jnp.transpose(w_hh).astype(jnp.float32))
    r = LANES
    slab = slab.at[r, :H].set((b_ih + b_hh).astype(jnp.float32))
    slab = slab.at[r + 1:r + 1 + I, :H].set(jnp.transpose(w_ih).astype(jnp.float32))
    slab = slab.at[r + 1 + I:r + 1 + I + O, :H].set(w_fc.astype(jnp.float32))
    slab = slab.at[r + 1 + I + O, :O].set(b_fc.astype(jnp.float32))
    return slab


def _rnn_controller_kernel(x_ref, p_ref, out_ref, *, n_batch, n_steps, n_in, n_out):
    """Whole RNN (tanh) + final Linear in one grid-less invocation.

    x_ref  : (T*B, I)      time-major flattened input
    p_ref  : (N_ROWS, 128) packed parameter slab (see prepare_params)
    out_ref: (B, O)        fc(last hidden state)
    """
    B, T, I, O = n_batch, n_steps, n_in, n_out
    ROW_B = LANES
    ROW_WIH = ROW_B + 1
    ROW_WFC = ROW_WIH + I
    ROW_BFC = ROW_WFC + O

    x = x_ref[...]                                              # (T*B, I)

    # --- Hoisted input projection on the VPU -------------------------------
    # K = I = 3 would be >95% MXU padding, so do I broadcast multiply-adds
    # instead, once over all timesteps, outside the recurrence.
    # Padded lanes (>= H) stay exactly 0.
    xp = jnp.broadcast_to(p_ref[ROW_B:ROW_B + 1, :], (T * B, LANES))
    for i in range(I):
        xp = xp + x[:, i:i + 1] * p_ref[ROW_WIH + i:ROW_WIH + i + 1, :]

    # --- Recurrence: only h @ W_hh on the serial critical path (MXU) -------
    # W_hh is pre-padded to (128, 128) zeros, so h stays a full-lane (B, 128)
    # tile with the true state in lanes [0, H); padded lanes remain tanh(0)=0.
    w_hh = p_ref[0:LANES, :]                                    # load once
    h = jnp.zeros((B, LANES), jnp.float32)
    for t in range(T):                                          # T static -> full unroll
        h = jnp.tanh(xp[t * B:(t + 1) * B, :]
                     + jnp.dot(h, w_hh, preferred_element_type=jnp.float32))

    # --- Final Linear on VPU/XLU (N = O = 1: multiply + lane reduction) ----
    cols = []
    for o in range(O):
        w_o = p_ref[ROW_WFC + o:ROW_WFC + o + 1, :]             # (1, 128)
        cols.append(jnp.sum(h * w_o, axis=-1, keepdims=True))   # (B, 1)
    fc = cols[0] if O == 1 else jnp.concatenate(cols, axis=-1)  # (B, O)
    b_fc = p_ref[ROW_BFC:ROW_BFC + 1, 0:O]                      # (1, O)
    out_ref[...] = (fc + b_fc).astype(out_ref.dtype)


def rnn_controller_forward(x, params, *, output_size):
    """x: (B, T, I) batch-first, like nn.RNN(batch_first=True).
    params: slab from prepare_params (built once at init).
    Returns (B, output_size)."""
    B, T, I = x.shape
    O = output_size

    # Time-major flatten so each unrolled step reads a contiguous leading-dim
    # slice of the projected input (no per-step mid-axis slicing/relayout).
    x_tm = jnp.transpose(x, (1, 0, 2)).reshape(T * B, I).astype(jnp.float32)

    kernel = functools.partial(_rnn_controller_kernel,
                               n_batch=B, n_steps=T, n_in=I, n_out=O)

    vmem = lambda: pl.BlockSpec(memory_space=pltpu.MemorySpace.VMEM)
    cost = pl.CostEstimate(
        flops=2 * (T * B * I * LANES + T * B * LANES * LANES + B * LANES * O),
        transcendentals=T * B * LANES,
        bytes_accessed=4 * (T * B * I + params.shape[0] * params.shape[1] + B * O),
    )

    return pl.pallas_call(
        kernel,
        out_shape=jax.ShapeDtypeStruct((B, O), jnp.float32),
        in_specs=[vmem(), vmem()],
        out_specs=vmem(),
        cost_estimate=cost,
    )(x_tm, params)


def reference_forward(x, w_ih, w_hh, b_ih, b_hh, w_fc, b_fc):
    """Pure-JAX reference matching PyTorch nn.RNN(tanh) + Linear semantics."""
    B, T, I = x.shape
    H = w_ih.shape[0]
    h0 = jnp.zeros((B, H), jnp.float32)

    def step(h, x_t):
        h_new = jnp.tanh(x_t @ w_ih.T + b_ih + h @ w_hh.T + b_hh)
        return h_new, None

    h_last, _ = jax.lax.scan(step, h0, jnp.transpose(x, (1, 0, 2)))
    return h_last @ w_fc.T + b_fc


if __name__ == "__main__":
    # Module defaults: input_size=3, hidden_size=10, output_size=1
    B, T, I, H, O = 2, 8, 3, 10, 1

    key = jax.random.PRNGKey(0)
    kx, k1, k2, k3, k4, k5, k6 = jax.random.split(key, 7)

    # Deterministic PyTorch-style init: U(-1/sqrt(H), 1/sqrt(H))
    s = 1.0 / jnp.sqrt(jnp.float32(H))
    x = jax.random.normal(kx, (B, T, I), dtype=jnp.float32)
    w_ih = jax.random.uniform(k1, (H, I), minval=-s, maxval=s, dtype=jnp.float32)
    w_hh = jax.random.uniform(k2, (H, H), minval=-s, maxval=s, dtype=jnp.float32)
    b_ih = jax.random.uniform(k3, (H,), minval=-s, maxval=s, dtype=jnp.float32)
    b_hh = jax.random.uniform(k4, (H,), minval=-s, maxval=s, dtype=jnp.float32)
    w_fc = jax.random.uniform(k5, (O, H), minval=-s, maxval=s, dtype=jnp.float32)
    b_fc = jax.random.uniform(k6, (O,), minval=-s, maxval=s, dtype=jnp.float32)

    # One-time parameter packing (off the per-call path).
    params = jax.block_until_ready(
        prepare_params(w_ih, w_hh, b_ih, b_hh, w_fc, b_fc))

    fwd = jax.jit(functools.partial(rnn_controller_forward, output_size=O))
    out = jax.block_until_ready(fwd(x, params))

    ref = reference_forward(x, w_ih, w_hh, b_ih, b_hh, w_fc, b_fc)
    assert out.shape == (B, O), f"bad output shape {out.shape}"
    assert jnp.allclose(out, ref, atol=1e-5, rtol=1e-5), \
        f"mismatch: max err {jnp.max(jnp.abs(out - ref))}"

    print("KERNEL_OK")
</pallas_src>

<mosaic_0001>
module attributes {stable_mosaic.version = 11 : i64} {
  func.func @_rnn_controller_kernel(%arg0: memref<16x3xf32, #tpu.memory_space<vmem>>, %arg1: memref<136x128xf32, #tpu.memory_space<vmem>>, %arg2: memref<2x1xf32, #tpu.memory_space<vmem>>) attributes {dimension_semantics = [], scalar_prefetch = 0 : i64, scratch_operands = 0 : i64, tpu.core_type = #tpu.core_type<tc>} {
    %c0 = arith.constant 0 : index
    %c0_0 = arith.constant 0 : index
    %0 = vector.load %arg0[%c0, %c0_0] : memref<16x3xf32, #tpu.memory_space<vmem>>, vector<16x3xf32>
    %c128 = arith.constant 128 : index
    %c0_1 = arith.constant 0 : index
    %1 = vector.load %arg1[%c128, %c0_1] : memref<136x128xf32, #tpu.memory_space<vmem>>, vector<1x128xf32>
    %2 = vector.shape_cast %1 : vector<1x128xf32> to vector<1x128xf32>
    %3 = vector.broadcast %2 : vector<1x128xf32> to vector<16x128xf32>
    %4 = vector.extract_strided_slice %0 {offsets = [0, 0], sizes = [16, 1], strides = [1, 1]} : vector<16x3xf32> to vector<16x1xf32>
    %c129 = arith.constant 129 : index
    %c0_2 = arith.constant 0 : index
    %5 = vector.load %arg1[%c129, %c0_2] : memref<136x128xf32, #tpu.memory_space<vmem>>, vector<1x128xf32>
    %6 = vector.broadcast %4 : vector<16x1xf32> to vector<16x128xf32>
    %7 = vector.broadcast %5 : vector<1x128xf32> to vector<16x128xf32>
    %8 = arith.mulf %6, %7 : vector<16x128xf32>
    %9 = arith.addf %3, %8 : vector<16x128xf32>
    %10 = vector.extract_strided_slice %0 {offsets = [0, 1], sizes = [16, 1], strides = [1, 1]} : vector<16x3xf32> to vector<16x1xf32>
    %c130 = arith.constant 130 : index
    %c0_3 = arith.constant 0 : index
    %11 = vector.load %arg1[%c130, %c0_3] : memref<136x128xf32, #tpu.memory_space<vmem>>, vector<1x128xf32>
    %12 = vector.broadcast %10 : vector<16x1xf32> to vector<16x128xf32>
    %13 = vector.broadcast %11 : vector<1x128xf32> to vector<16x128xf32>
    %14 = arith.mulf %12, %13 : vector<16x128xf32>
    %15 = arith.addf %9, %14 : vector<16x128xf32>
    %16 = vector.extract_strided_slice %0 {offsets = [0, 2], sizes = [16, 1], strides = [1, 1]} : vector<16x3xf32> to vector<16x1xf32>
    %c131 = arith.constant 131 : index
    %c0_4 = arith.constant 0 : index
    %17 = vector.load %arg1[%c131, %c0_4] : memref<136x128xf32, #tpu.memory_space<vmem>>, vector<1x128xf32>
    %18 = vector.broadcast %16 : vector<16x1xf32> to vector<16x128xf32>
    %19 = vector.broadcast %17 : vector<1x128xf32> to vector<16x128xf32>
    %20 = arith.mulf %18, %19 : vector<16x128xf32>
    %21 = arith.addf %15, %20 : vector<16x128xf32>
    %c0_5 = arith.constant 0 : index
    %c0_6 = arith.constant 0 : index
    %22 = vector.load %arg1[%c0_5, %c0_6] : memref<136x128xf32, #tpu.memory_space<vmem>>, vector<128x128xf32>
    %cst = arith.constant 0.000000e+00 : f32
    %23 = vector.broadcast %cst : f32 to vector<2x128xf32>
    %24 = vector.extract_strided_slice %21 {offsets = [0, 0], sizes = [2, 128], strides = [1, 1]} : vector<16x128xf32> to vector<2x128xf32>
    %cst_7 = arith.constant dense<0.000000e+00> : vector<2x128xf32>
    %25 = tpu.matmul %23, %22, %cst_7 {dimension_numbers = #tpu.dot_dimension_numbers<[1], [0], [0], [1], [0, 0, 1, 1], [], []>} : vector<2x128xf32>, vector<128x128xf32>, vector<2x128xf32> -> vector<2x128xf32>
    %26 = arith.addf %24, %25 : vector<2x128xf32>
    %27 = math.tanh %26 : vector<2x128xf32>
    %28 = vector.extract_strided_slice %21 {offsets = [2, 0], sizes = [2, 128], strides = [1, 1]} : vector<16x128xf32> to vector<2x128xf32>
    %cst_8 = arith.constant dense<0.000000e+00> : vector<2x128xf32>
    %29 = tpu.matmul %27, %22, %cst_8 {dimension_numbers = #tpu.dot_dimension_numbers<[1], [0], [0], [1], [0, 0, 1, 1], [], []>} : vector<2x128xf32>, vector<128x128xf32>, vector<2x128xf32> -> vector<2x128xf32>
    %30 = arith.addf %28, %29 : vector<2x128xf32>
    %31 = math.tanh %30 : vector<2x128xf32>
    %32 = vector.extract_strided_slice %21 {offsets = [4, 0], sizes = [2, 128], strides = [1, 1]} : vector<16x128xf32> to vector<2x128xf32>
    %cst_9 = arith.constant dense<0.000000e+00> : vector<2x128xf32>
    %33 = tpu.matmul %31, %22, %cst_9 {dimension_numbers = #tpu.dot_dimension_numbers<[1], [0], [0], [1], [0, 0, 1, 1], [], []>} : vector<2x128xf32>, vector<128x128xf32>, vector<2x128xf32> -> vector<2x128xf32>
    %34 = arith.addf %32, %33 : vector<2x128xf32>
    %35 = math.tanh %34 : vector<2x128xf32>
    %36 = vector.extract_strided_slice %21 {offsets = [6, 0], sizes = [2, 128], strides = [1, 1]} : vector<16x128xf32> to vector<2x128xf32>
    %cst_10 = arith.constant dense<0.000000e+00> : vector<2x128xf32>
    %37 = tpu.matmul %35, %22, %cst_10 {dimension_numbers = #tpu.dot_dimension_numbers<[1], [0], [0], [1], [0, 0, 1, 1], [], []>} : vector<2x128xf32>, vector<128x128xf32>, vector<2x128xf32> -> vector<2x128xf32>
    %38 = arith.addf %36, %37 : vector<2x128xf32>
    %39 = math.tanh %38 : vector<2x128xf32>
    %40 = vector.extract_strided_slice %21 {offsets = [8, 0], sizes = [2, 128], strides = [1, 1]} : vector<16x128xf32> to vector<2x128xf32>
    %cst_11 = arith.constant dense<0.000000e+00> : vector<2x128xf32>
    %41 = tpu.matmul %39, %22, %cst_11 {dimension_numbers = #tpu.dot_dimension_numbers<[1], [0], [0], [1], [0, 0, 1, 1], [], []>} : vector<2x128xf32>, vector<128x128xf32>, vector<2x128xf32> -> vector<2x128xf32>
    %42 = arith.addf %40, %41 : vector<2x128xf32>
    %43 = math.tanh %42 : vector<2x128xf32>
    %44 = vector.extract_strided_slice %21 {offsets = [10, 0], sizes = [2, 128], strides = [1, 1]} : vector<16x128xf32> to vector<2x128xf32>
    %cst_12 = arith.constant dense<0.000000e+00> : vector<2x128xf32>
    %45 = tpu.matmul %43, %22, %cst_12 {dimension_numbers = #tpu.dot_dimension_numbers<[1], [0], [0], [1], [0, 0, 1, 1], [], []>} : vector<2x128xf32>, vector<128x128xf32>, vector<2x128xf32> -> vector<2x128xf32>
    %46 = arith.addf %44, %45 : vector<2x128xf32>
    %47 = math.tanh %46 : vector<2x128xf32>
    %48 = vector.extract_strided_slice %21 {offsets = [12, 0], sizes = [2, 128], strides = [1, 1]} : vector<16x128xf32> to vector<2x128xf32>
    %cst_13 = arith.constant dense<0.000000e+00> : vector<2x128xf32>
    %49 = tpu.matmul %47, %22, %cst_13 {dimension_numbers = #tpu.dot_dimension_numbers<[1], [0], [0], [1], [0, 0, 1, 1], [], []>} : vector<2x128xf32>, vector<128x128xf32>, vector<2x128xf32> -> vector<2x128xf32>
    %50 = arith.addf %48, %49 : vector<2x128xf32>
    %51 = math.tanh %50 : vector<2x128xf32>
    %52 = vector.extract_strided_slice %21 {offsets = [14, 0], sizes = [2, 128], strides = [1, 1]} : vector<16x128xf32> to vector<2x128xf32>
    %cst_14 = arith.constant dense<0.000000e+00> : vector<2x128xf32>
    %53 = tpu.matmul %51, %22, %cst_14 {dimension_numbers = #tpu.dot_dimension_numbers<[1], [0], [0], [1], [0, 0, 1, 1], [], []>} : vector<2x128xf32>, vector<128x128xf32>, vector<2x128xf32> -> vector<2x128xf32>
    %54 = arith.addf %52, %53 : vector<2x128xf32>
    %55 = math.tanh %54 : vector<2x128xf32>
    %c132 = arith.constant 132 : index
    %c0_15 = arith.constant 0 : index
    %56 = vector.load %arg1[%c132, %c0_15] : memref<136x128xf32, #tpu.memory_space<vmem>>, vector<1x128xf32>
    %57 = vector.broadcast %56 : vector<1x128xf32> to vector<2x128xf32>
    %58 = arith.mulf %55, %57 : vector<2x128xf32>
    %cst_16 = arith.constant dense<0.000000e+00> : vector<2xf32>
    %59 = vector.multi_reduction <add>, %58, %cst_16 [1] : vector<2x128xf32> to vector<2xf32>
    %60 = vector.shape_cast %59 : vector<2xf32> to vector<2x1xf32>
    %c133 = arith.constant 133 : index
    %c0_17 = arith.constant 0 : index
    %61 = vector.load %arg1[%c133, %c0_17] : memref<136x128xf32, #tpu.memory_space<vmem>>, vector<1x1xf32>
    %62 = vector.broadcast %61 : vector<1x1xf32> to vector<2x1xf32>
    %63 = arith.addf %60, %62 : vector<2x1xf32>
    %c0_18 = arith.constant 0 : index
    %c0_19 = arith.constant 0 : index
    %64 = vector.load %arg2[%c0_18, %c0_19] : memref<2x1xf32, #tpu.memory_space<vmem>>, vector<2x1xf32>
    tpu.vector_store %arg2[%c0_18, %c0_19], %63 {strides = array<i32>} : memref<2x1xf32, #tpu.memory_space<vmem>>, vector<2x1xf32>,
    return
  }
}

</mosaic_0001>

<llo_original>
// kernel: rnn_controller_forward.1
$region0: #{rnn_controller_forward.1}
  #allocation0 [shape = 'u32[]', space=smem, size = 0x4, offset = 0x4, fixed_abs, tag = 'smem constant byte address 0x4 - core index']
  #allocation1 [shape = 'u32[144,128]{1,0:T(1,128)}', space=vmem, size = 0x12000, scoped, tag = 'internal scratch']
  %s0 = inlined_call_operand.vmem [shape: f32[16,3], index: 0, kind: input, shape index: {}]
  %s1 = inlined_call_operand.hbm [shape: f32[136,128], index: 1, kind: input, shape index: {}]
  %s2 = inlined_call_operand.vmem [shape: f32[2,1], index: 2, kind: output, shape index: {}]
  %s3 = sld [smem:[#allocation0]]
  $region22: #{rnn_controller_forward.1} parent=0
    _
  %s5 = ssub.s32 1, %s3
  %s6 = scalar_select 0, %s5, %s3
  $region1: #{rnn_controller_forward.1} parent=0
    #allocation2 [shape = 'u8[69632]{0}', space=vmem, size = 0x11000, scoped, tag = 'input window, operand 1, single buffered']
    #allocation3 [shape = 's32[1]{0}', space=sflag, size = 0x4, scoped, tag = 'scoped memory for rnn_controller_forward.1']
    %7 = vsyncpa [#allocation3], 0
    // Predicated region
    $region2: #{rnn_controller_forward.1} parent=1 // pred_check
      _
    $region3: #{rnn_controller_forward.1} parent=1 // pred_check_branch
      %9 = sbr.rel (0) target = $region5
    $region4: #{rnn_controller_forward.1} parent=1 // pred_region
      _
    $region5: #{rnn_controller_forward.1} parent=1 // pred_fallthru
      _
    // Predicated region
    $region6: #{rnn_controller_forward.1} parent=1 // pred_check
      _
    $region7: #{rnn_controller_forward.1} parent=1 // pred_check_branch
      %11 = sbr.rel (0) target = $region9
    $region8: #{rnn_controller_forward.1} parent=1 // pred_region
      %s13 = ssub.s32 2176, 2176
      %14 = vsyncadd [#allocation3], %s13
      %s15 = sshll.u32 [#allocation2], 4
      %s16 = int_to_ptr.vmem [resolvable:$true] %s15
      %21 = dma.hbm_to_vmem [thread:$0]  %s1, 2176, %s16, [#allocation3], 128, 128, 8
    $region9: #{rnn_controller_forward.1} parent=1 // pred_fallthru
      _
    // Predicated region
    $region10: #{rnn_controller_forward.1} parent=1 // pred_check
      _
    $region11: #{rnn_controller_forward.1} parent=1 // pred_check_branch
      %23 = sbr.rel (0) target = $region13
    $region12: #{rnn_controller_forward.1} parent=1 // pred_region
      %24 = dma.done [#allocation3], 2176
    $region13: #{rnn_controller_forward.1} parent=1 // pred_fallthru
      _
    %v25 = vld [vmem:[%s0] sm:$0xff]
    %v26 = vld [vmem:[%s0 + $0x8] sm:$0xff]
    %v27 = vld [vmem:[#allocation2 + $0x80] sm:$0x1]
    %v28 = vlaneseq
    %v29 = vshrl.u32 %v28, 7
    %v30 = vsub.s32 0, %v29
    %v31 = vrot.slane %v27, %v30
    %v32 = vld [vmem:[#allocation2 + $0x81] sm:$0x1]
    %34 = vset.pattern.permute.xlu0 0
    %35 = vperm.xlu0 %34, %v25
    %v36 = vpop.permute.xlu0 %35
    %39 = vset.pattern.permute.xlu0 0
    %40 = vperm.xlu0 %39, %v26
    %v41 = vpop.permute.xlu0 %40
    %v43 = vlaneseq
    %v44 = vshrl.u32 %v43, 7
    %v45 = vsub.s32 0, %v44
    %v46 = vrot.slane %v32, %v45
    %v47 = vmul.f32 %v36, %v46
    %v48 = vmul.f32 %v41, %v46
    %v49 = vadd.f32 %v31, %v47
    %v50 = vadd.f32 %v31, %v48
    %v51 = vld [vmem:[#allocation2 + $0x82] sm:$0x1]
    %52 = vset.pattern.permute.xlu0 1
    %53 = vperm.xlu0 %52, %v25
    %v54 = vpop.permute.xlu0 %53
    %56 = vset.pattern.permute.xlu0 1
    %57 = vperm.xlu0 %56, %v26
    %v58 = vpop.permute.xlu0 %57
    %v60 = vlaneseq
    %v61 = vshrl.u32 %v60, 7
    %v62 = vsub.s32 0, %v61
    %v63 = vrot.slane %v51, %v62
    %v64 = vmul.f32 %v54, %v63
    %v65 = vmul.f32 %v58, %v63
    %v66 = vadd.f32 %v49, %v64
    %v67 = vadd.f32 %v50, %v65
    %v68 = vld [vmem:[#allocation2 + $0x83] sm:$0x1]
    %69 = vset.pattern.permute.xlu0 2
    %70 = vperm.xlu0 %69, %v25
    %v71 = vpop.permute.xlu0 %70
    %73 = vset.pattern.permute.xlu0 2
    %74 = vperm.xlu0 %73, %v26
    %v75 = vpop.permute.xlu0 %74
    %v77 = vlaneseq
    %v78 = vshrl.u32 %v77, 7
    %v79 = vsub.s32 0, %v78
    %v80 = vrot.slane %v68, %v79
    %v81 = vmul.f32 %v71, %v80
    %v82 = vmul.f32 %v75, %v80
    %v83 = vadd.f32 %v66, %v81
    %v84 = vadd.f32 %v67, %v82
    %v85 = vld [vmem:[#allocation2] sm:$0xff]
    %v86 = vld [vmem:[#allocation2 + $0x8] sm:$0xff]
    %v87 = vld [vmem:[#allocation2 + $0x10] sm:$0xff]
    %v88 = vld [vmem:[#allocation2 + $0x18] sm:$0xff]
    %v89 = vld [vmem:[#allocation2 + $0x20] sm:$0xff]
    %v90 = vld [vmem:[#allocation2 + $0x28] sm:$0xff]
    %v91 = vld [vmem:[#allocation2 + $0x30] sm:$0xff]
    %v92 = vld [vmem:[#allocation2 + $0x38] sm:$0xff]
    %v93 = vld [vmem:[#allocation2 + $0x40] sm:$0xff]
    %v94 = vld [vmem:[#allocation2 + $0x48] sm:$0xff]
    %v95 = vld [vmem:[#allocation2 + $0x50] sm:$0xff]
    %v96 = vld [vmem:[#allocation2 + $0x58] sm:$0xff]
    %v97 = vld [vmem:[#allocation2 + $0x60] sm:$0xff]
    %v98 = vld [vmem:[#allocation2 + $0x68] sm:$0xff]
    %v99 = vld [vmem:[#allocation2 + $0x70] sm:$0xff]
    %v100 = vld [vmem:[#allocation2 + $0x78] sm:$0xff]
    %101 = vmatprep.subr.mxu0 0.0
    %102 = vmatpush1.msra.mxu0 %v100
    %103 = vmatprep.subr.mxu0 0.0
    %104 = vmatpush1.msra.mxu0 %v99
    %105 = vmatprep.subr.mxu0 0.0
    %106 = vmatpush1.msra.mxu0 %v98
    %107 = vmatprep.subr.mxu0 0.0
    %108 = vmatpush1.msra.mxu0 %v97
    %109 = vmatprep.subr.mxu0 0.0
    %110 = vmatpush1.msra.mxu0 %v96
    %111 = vmatprep.subr.mxu0 0.0
    %112 = vmatpush1.msra.mxu0 %v95
    %113 = vmatprep.subr.mxu0 0.0
    %114 = vmatpush1.msra.mxu0 %v94
    %115 = vmatprep.subr.mxu0 0.0
    %116 = vmatpush1.msra.mxu0 %v93
    %117 = vmatprep.subr.mxu0 0.0
    %118 = vmatpush1.msra.mxu0 %v92
    %119 = vmatprep.subr.mxu0 0.0
    %120 = vmatpush1.msra.mxu0 %v91
    %121 = vmatprep.subr.mxu0 0.0
    %122 = vmatpush1.msra.mxu0 %v90
    %123 = vmatprep.subr.mxu0 0.0
    %124 = vmatpush1.msra.mxu0 %v89
    %125 = vmatprep.subr.mxu0 0.0
    %126 = vmatpush1.msra.mxu0 %v88
    %127 = vmatprep.subr.mxu0 0.0
    %128 = vmatpush1.msra.mxu0 %v87
    %129 = vmatprep.subr.mxu0 0.0
    %130 = vmatpush1.msra.mxu0 %v86
    %131 = vmatprep.subr.mxu0 0.0
    %132 = vmatpush1.msra.mxu0 %v85
    %133 = vmatprep.subr.mxu0 0.0
    %134 = vmatpush2.msra.mxu0 0.0
    %135 = vmatprep.subr.mxu0 0.0
    %136 = vmatpush2.msra.mxu0 0.0
    %137 = vmatprep.subr.mxu0 0.0
    %138 = vmatpush2.msra.mxu0 0.0
    %139 = vmatprep.subr.mxu0 0.0
    %140 = vmatpush2.msra.mxu0 0.0
    %141 = vmatprep.subr.mxu0 0.0
    %142 = vmatpush2.msra.mxu0 0.0
    %143 = vmatprep.subr.mxu0 0.0
    %144 = vmatpush2.msra.mxu0 0.0
    %145 = vmatprep.subr.mxu0 0.0
    %146 = vmatpush2.msra.mxu0 0.0
    %147 = vmatprep.subr.mxu0 0.0
    %148 = vmatpush2.msra.mxu0 0.0
    %149 = vmatprep.subr.mxu0 0.0
    %150 = vmatpush2.msra.mxu0 0.0
    %151 = vmatprep.subr.mxu0 0.0
    %152 = vmatpush2.msra.mxu0 0.0
    %153 = vmatprep.subr.mxu0 0.0
    %154 = vmatpush2.msra.mxu0 0.0
    %155 = vmatprep.subr.mxu0 0.0
    %156 = vmatpush2.msra.mxu0 0.0
    %157 = vmatprep.subr.mxu0 0.0
    %158 = vmatpush2.msra.mxu0 0.0
    %159 = vmatprep.subr.mxu0 0.0
    %160 = vmatpush2.msra.mxu0 0.0
    %161 = vmatprep.subr.mxu0 0.0
    %162 = vmatpush2.msra.mxu0 0.0
    %163 = vmatprep.subr.mxu0 0.0
    %164 = vmatpush2.msra.mxu0 0.0
    %165 = vmatprep.mubr.f32.mxu0 0.0
    %166 = vmatmul.mubr.f32.gmra.mxu0 0.0
    %v167 = vpop.f32.mrf.mxu0
    %v168 = vadd.f32 0.0, %v167
    %v169 = vpop.f32.mrf.mxu0
    %170 = vdwg.mxu0
    %v171 = vadd.f32 %v83, %v168
    %v172 = vtanh.pop %v171
    %173 = vmatprep.subr.mxu0 0.0
    %174 = vmatpush1.msra.mxu0 %v100
    %175 = vmatprep.subr.mxu0 0.0
    %176 = vmatpush1.msra.mxu0 %v99
    %177 = vmatprep.subr.mxu0 0.0
    %178 = vmatpush1.msra.mxu0 %v98
    %179 = vmatprep.subr.mxu0 0.0
    %180 = vmatpush1.msra.mxu0 %v97
    %181 = vmatprep.subr.mxu0 0.0
    %182 = vmatpush1.msra.mxu0 %v96
    %183 = vmatprep.subr.mxu0 0.0
    %184 = vmatpush1.msra.mxu0 %v95
    %185 = vmatprep.subr.mxu0 0.0
    %186 = vmatpush1.msra.mxu0 %v94
    %187 = vmatprep.subr.mxu0 0.0
    %188 = vmatpush1.msra.mxu0 %v93
    %189 = vmatprep.subr.mxu0 0.0
    %190 = vmatpush1.msra.mxu0 %v92
    %191 = vmatprep.subr.mxu0 0.0
    %192 = vmatpush1.msra.mxu0 %v91
    %193 = vmatprep.subr.mxu0 0.0
    %194 = vmatpush1.msra.mxu0 %v90
    %195 = vmatprep.subr.mxu0 0.0
    %196 = vmatpush1.msra.mxu0 %v89
    %197 = vmatprep.subr.mxu0 0.0
    %198 = vmatpush1.msra.mxu0 %v88
    %199 = vmatprep.subr.mxu0 0.0
    %200 = vmatpush1.msra.mxu0 %v87
    %201 = vmatprep.subr.mxu0 0.0
    %202 = vmatpush1.msra.mxu0 %v86
    %203 = vmatprep.subr.mxu0 0.0
    %204 = vmatpush1.msra.mxu0 %v85
    %205 = vmatprep.subr.mxu0 0.0
    %206 = vmatpush2.msra.mxu0 0.0
    %207 = vmatprep.subr.mxu0 0.0
    %208 = vmatpush2.msra.mxu0 0.0
    %209 = vmatprep.subr.mxu0 0.0
    %210 = vmatpush2.msra.mxu0 0.0
    %211 = vmatprep.subr.mxu0 0.0
    %212 = vmatpush2.msra.mxu0 0.0
    %213 = vmatprep.subr.mxu0 0.0
    %214 = vmatpush2.msra.mxu0 0.0
    %215 = vmatprep.subr.mxu0 0.0
    %216 = vmatpush2.msra.mxu0 0.0
    %217 = vmatprep.subr.mxu0 0.0
    %218 = vmatpush2.msra.mxu0 0.0
    %219 = vmatprep.subr.mxu0 0.0
    %220 = vmatpush2.msra.mxu0 0.0
    %221 = vmatprep.subr.mxu0 0.0
    %222 = vmatpush2.msra.mxu0 0.0
    %223 = vmatprep.subr.mxu0 0.0
    %224 = vmatpush2.msra.mxu0 0.0
    %225 = vmatprep.subr.mxu0 0.0
    %226 = vmatpush2.msra.mxu0 0.0
    %227 = vmatprep.subr.mxu0 0.0
    %228 = vmatpush2.msra.mxu0 0.0
    %229 = vmatprep.subr.mxu0 0.0
    %230 = vmatpush2.msra.mxu0 0.0
    %231 = vmatprep.subr.mxu0 0.0
    %232 = vmatpush2.msra.mxu0 0.0
    %233 = vmatprep.subr.mxu0 0.0
    %234 = vmatpush2.msra.mxu0 0.0
    %235 = vmatprep.subr.mxu0 0.0
    %236 = vmatpush2.msra.mxu0 0.0
    %237 = vmatprep.mubr.f32.mxu0 0.0
    %238 = vmatmul.mubr.f32.gmra.mxu0 %v172
    %v239 = vpop.f32.mrf.mxu0
    %v240 = vadd.f32 0.0, %v239
    %v241 = vpop.f32.mrf.mxu0
    %242 = vdwg.mxu0
    %v244 = vrot.slane %v240, 6
    %v246 = vadd.f32 %v83, %v244
    %v247 = vtanh.pop %v246
    %v249 = vrot.slane %v247, 2
    %251 = vmatprep.subr.mxu0 0.0
    %252 = vmatpush1.msra.mxu0 %v100
    %253 = vmatprep.subr.mxu0 0.0
    %254 = vmatpush1.msra.mxu0 %v99
    %255 = vmatprep.subr.mxu0 0.0
    %256 = vmatpush1.msra.mxu0 %v98
    %257 = vmatprep.subr.mxu0 0.0
    %258 = vmatpush1.msra.mxu0 %v97
    %259 = vmatprep.subr.mxu0 0.0
    %260 = vmatpush1.msra.mxu0 %v96
    %261 = vmatprep.subr.mxu0 0.0
    %262 = vmatpush1.msra.mxu0 %v95
    %263 = vmatprep.subr.mxu0 0.0
    %264 = vmatpush1.msra.mxu0 %v94
    %265 = vmatprep.subr.mxu0 0.0
    %266 = vmatpush1.msra.mxu0 %v93
    %267 = vmatprep.subr.mxu0 0.0
    %268 = vmatpush1.msra.mxu0 %v92
    %269 = vmatprep.subr.mxu0 0.0
    %270 = vmatpush1.msra.mxu0 %v91
    %271 = vmatprep.subr.mxu0 0.0
    %272 = vmatpush1.msra.mxu0 %v90
    %273 = vmatprep.subr.mxu0 0.0
    %274 = vmatpush1.msra.mxu0 %v89
    %275 = vmatprep.subr.mxu0 0.0
    %276 = vmatpush1.msra.mxu0 %v88
    %277 = vmatprep.subr.mxu0 0.0
    %278 = vmatpush1.msra.mxu0 %v87
    %279 = vmatprep.subr.mxu0 0.0
    %280 = vmatpush1.msra.mxu0 %v86
    %281 = vmatprep.subr.mxu0 0.0
    %282 = vmatpush1.msra.mxu0 %v85
    %283 = vmatprep.subr.mxu0 0.0
    %284 = vmatpush2.msra.mxu0 0.0
    %285 = vmatprep.subr.mxu0 0.0
    %286 = vmatpush2.msra.mxu0 0.0
    %287 = vmatprep.subr.mxu0 0.0
    %288 = vmatpush2.msra.mxu0 0.0
    %289 = vmatprep.subr.mxu0 0.0
    %290 = vmatpush2.msra.mxu0 0.0
    %291 = vmatprep.subr.mxu0 0.0
    %292 = vmatpush2.msra.mxu0 0.0
    %293 = vmatprep.subr.mxu0 0.0
    %294 = vmatpush2.msra.mxu0 0.0
    %295 = vmatprep.subr.mxu0 0.0
    %296 = vmatpush2.msra.mxu0 0.0
    %297 = vmatprep.subr.mxu0 0.0
    %298 = vmatpush2.msra.mxu0 0.0
    %299 = vmatprep.subr.mxu0 0.0
    %300 = vmatpush2.msra.mxu0 0.0
    %301 = vmatprep.subr.mxu0 0.0
    %302 = vmatpush2.msra.mxu0 0.0
    %303 = vmatprep.subr.mxu0 0.0
    %304 = vmatpush2.msra.mxu0 0.0
    %305 = vmatprep.subr.mxu0 0.0
    %306 = vmatpush2.msra.mxu0 0.0
    %307 = vmatprep.subr.mxu0 0.0
    %308 = vmatpush2.msra.mxu0 0.0
    %309 = vmatprep.subr.mxu0 0.0
    %310 = vmatpush2.msra.mxu0 0.0
    %311 = vmatprep.subr.mxu0 0.0
    %312 = vmatpush2.msra.mxu0 0.0
    %313 = vmatprep.subr.mxu0 0.0
    %314 = vmatpush2.msra.mxu0 0.0
    %315 = vmatprep.mubr.f32.mxu0 0.0
    %316 = vmatmul.mubr.f32.gmra.mxu0 %v249
    %v317 = vpop.f32.mrf.mxu0
    %v318 = vadd.f32 0.0, %v317
    %v319 = vpop.f32.mrf.mxu0
    %320 = vdwg.mxu0
    %v322 = vrot.slane %v318, 4
    %v324 = vadd.f32 %v83, %v322
    %v325 = vtanh.pop %v324
    %v327 = vrot.slane %v325, 4
    %329 = vmatprep.subr.mxu0 0.0
    %330 = vmatpush1.msra.mxu0 %v100
    %331 = vmatprep.subr.mxu0 0.0
    %332 = vmatpush1.msra.mxu0 %v99
    %333 = vmatprep.subr.mxu0 0.0
    %334 = vmatpush1.msra.mxu0 %v98
    %335 = vmatprep.subr.mxu0 0.0
    %336 = vmatpush1.msra.mxu0 %v97
    %337 = vmatprep.subr.mxu0 0.0
    %338 = vmatpush1.msra.mxu0 %v96
    %339 = vmatprep.subr.mxu0 0.0
    %340 = vmatpush1.msra.mxu0 %v95
    %341 = vmatprep.subr.mxu0 0.0
    %342 = vmatpush1.msra.mxu0 %v94
    %343 = vmatprep.subr.mxu0 0.0
    %344 = vmatpush1.msra.mxu0 %v93
    %345 = vmatprep.subr.mxu0 0.0
    %346 = vmatpush1.msra.mxu0 %v92
    %347 = vmatprep.subr.mxu0 0.0
    %348 = vmatpush1.msra.mxu0 %v91
    %349 = vmatprep.subr.mxu0 0.0
    %350 = vmatpush1.msra.mxu0 %v90
    %351 = vmatprep.subr.mxu0 0.0
    %352 = vmatpush1.msra.mxu0 %v89
    %353 = vmatprep.subr.mxu0 0.0
    %354 = vmatpush1.msra.mxu0 %v88
    %355 = vmatprep.subr.mxu0 0.0
    %356 = vmatpush1.msra.mxu0 %v87
    %357 = vmatprep.subr.mxu0 0.0
    %358 = vmatpush1.msra.mxu0 %v86
    %359 = vmatprep.subr.mxu0 0.0
    %360 = vmatpush1.msra.mxu0 %v85
    %361 = vmatprep.subr.mxu0 0.0
    %362 = vmatpush2.msra.mxu0 0.0
    %363 = vmatprep.subr.mxu0 0.0
    %364 = vmatpush2.msra.mxu0 0.0
    %365 = vmatprep.subr.mxu0 0.0
    %366 = vmatpush2.msra.mxu0 0.0
    %367 = vmatprep.subr.mxu0 0.0
    %368 = vmatpush2.msra.mxu0 0.0
    %369 = vmatprep.subr.mxu0 0.0
    %370 = vmatpush2.msra.mxu0 0.0
    %371 = vmatprep.subr.mxu0 0.0
    %372 = vmatpush2.msra.mxu0 0.0
    %373 = vmatprep.subr.mxu0 0.0
    %374 = vmatpush2.msra.mxu0 0.0
    %375 = vmatprep.subr.mxu0 0.0
    %376 = vmatpush2.msra.mxu0 0.0
    %377 = vmatprep.subr.mxu0 0.0
    %378 = vmatpush2.msra.mxu0 0.0
    %379 = vmatprep.subr.mxu0 0.0
    %380 = vmatpush2.msra.mxu0 0.0
    %381 = vmatprep.subr.mxu0 0.0
    %382 = vmatpush2.msra.mxu0 0.0
    %383 = vmatprep.subr.mxu0 0.0
    %384 = vmatpush2.msra.mxu0 0.0
    %385 = vmatprep.subr.mxu0 0.0
    %386 = vmatpush2.msra.mxu0 0.0
    %387 = vmatprep.subr.mxu0 0.0
    %388 = vmatpush2.msra.mxu0 0.0
    %389 = vmatprep.subr.mxu0 0.0
    %390 = vmatpush2.msra.mxu0 0.0
    %391 = vmatprep.subr.mxu0 0.0
    %392 = vmatpush2.msra.mxu0 0.0
    %393 = vmatprep.mubr.f32.mxu0 0.0
    %394 = vmatmul.mubr.f32.gmra.mxu0 %v327
    %v395 = vpop.f32.mrf.mxu0
    %v396 = vadd.f32 0.0, %v395
    %v397 = vpop.f32.mrf.mxu0
    %398 = vdwg.mxu0
    %v400 = vrot.slane %v396, 2
    %v402 = vadd.f32 %v83, %v400
    %v403 = vtanh.pop %v402
    %v405 = vrot.slane %v403, 6
    %407 = vmatprep.subr.mxu0 0.0
    %408 = vmatpush1.msra.mxu0 %v100
    %409 = vmatprep.subr.mxu0 0.0
    %410 = vmatpush1.msra.mxu0 %v99
    %411 = vmatprep.subr.mxu0 0.0
    %412 = vmatpush1.msra.mxu0 %v98
    %413 = vmatprep.subr.mxu0 0.0
    %414 = vmatpush1.msra.mxu0 %v97
    %415 = vmatprep.subr.mxu0 0.0
    %416 = vmatpush1.msra.mxu0 %v96
    %417 = vmatprep.subr.mxu0 0.0
    %418 = vmatpush1.msra.mxu0 %v95
    %419 = vmatprep.subr.mxu0 0.0
    %420 = vmatpush1.msra.mxu0 %v94
    %421 = vmatprep.subr.mxu0 0.0
    %422 = vmatpush1.msra.mxu0 %v93
    %423 = vmatprep.subr.mxu0 0.0
    %424 = vmatpush1.msra.mxu0 %v92
    %425 = vmatprep.subr.mxu0 0.0
    %426 = vmatpush1.msra.mxu0 %v91
    %427 = vmatprep.subr.mxu0 0.0
    %428 = vmatpush1.msra.mxu0 %v90
    %429 = vmatprep.subr.mxu0 0.0
    %430 = vmatpush1.msra.mxu0 %v89
    %431 = vmatprep.subr.mxu0 0.0
    %432 = vmatpush1.msra.mxu0 %v88
    %433 = vmatprep.subr.mxu0 0.0
    %434 = vmatpush1.msra.mxu0 %v87
    %435 = vmatprep.subr.mxu0 0.0
    %436 = vmatpush1.msra.mxu0 %v86
    %437 = vmatprep.subr.mxu0 0.0
    %438 = vmatpush1.msra.mxu0 %v85
    %439 = vmatprep.subr.mxu0 0.0
    %440 = vmatpush2.msra.mxu0 0.0
    %441 = vmatprep.subr.mxu0 0.0
    %442 = vmatpush2.msra.mxu0 0.0
    %443 = vmatprep.subr.mxu0 0.0
    %444 = vmatpush2.msra.mxu0 0.0
    %445 = vmatprep.subr.mxu0 0.0
    %446 = vmatpush2.msra.mxu0 0.0
    %447 = vmatprep.subr.mxu0 0.0
    %448 = vmatpush2.msra.mxu0 0.0
    %449 = vmatprep.subr.mxu0 0.0
    %450 = vmatpush2.msra.mxu0 0.0
    %451 = vmatprep.subr.mxu0 0.0
    %452 = vmatpush2.msra.mxu0 0.0
    %453 = vmatprep.subr.mxu0 0.0
    %454 = vmatpush2.msra.mxu0 0.0
    %455 = vmatprep.subr.mxu0 0.0
    %456 = vmatpush2.msra.mxu0 0.0
    %457 = vmatprep.subr.mxu0 0.0
    %458 = vmatpush2.msra.mxu0 0.0
    %459 = vmatprep.subr.mxu0 0.0
    %460 = vmatpush2.msra.mxu0 0.0
    %461 = vmatprep.subr.mxu0 0.0
    %462 = vmatpush2.msra.mxu0 0.0
    %463 = vmatprep.subr.mxu0 0.0
    %464 = vmatpush2.msra.mxu0 0.0
    %465 = vmatprep.subr.mxu0 0.0
    %466 = vmatpush2.msra.mxu0 0.0
    %467 = vmatprep.subr.mxu0 0.0
    %468 = vmatpush2.msra.mxu0 0.0
    %469 = vmatprep.subr.mxu0 0.0
    %470 = vmatpush2.msra.mxu0 0.0
    %471 = vmatprep.mubr.f32.mxu0 0.0
    %472 = vmatmul.mubr.f32.gmra.mxu0 %v405
    %v473 = vpop.f32.mrf.mxu0
    %v474 = vadd.f32 0.0, %v473
    %v475 = vpop.f32.mrf.mxu0
    %476 = vdwg.mxu0
    %v477 = vadd.f32 %v84, %v474
    %v478 = vtanh.pop %v477
    %479 = vmatprep.subr.mxu0 0.0
    %480 = vmatpush1.msra.mxu0 %v100
    %481 = vmatprep.subr.mxu0 0.0
    %482 = vmatpush1.msra.mxu0 %v99
    %483 = vmatprep.subr.mxu0 0.0
    %484 = vmatpush1.msra.mxu0 %v98
    %485 = vmatprep.subr.mxu0 0.0
    %486 = vmatpush1.msra.mxu0 %v97
    %487 = vmatprep.subr.mxu0 0.0
    %488 = vmatpush1.msra.mxu0 %v96
    %489 = vmatprep.subr.mxu0 0.0
    %490 = vmatpush1.msra.mxu0 %v95
    %491 = vmatprep.subr.mxu0 0.0
    %492 = vmatpush1.msra.mxu0 %v94
    %493 = vmatprep.subr.mxu0 0.0
    %494 = vmatpush1.msra.mxu0 %v93
    %495 = vmatprep.subr.mxu0 0.0
    %496 = vmatpush1.msra.mxu0 %v92
    %497 = vmatprep.subr.mxu0 0.0
    %498 = vmatpush1.msra.mxu0 %v91
    %499 = vmatprep.subr.mxu0 0.0
    %500 = vmatpush1.msra.mxu0 %v90
    %501 = vmatprep.subr.mxu0 0.0
    %502 = vmatpush1.msra.mxu0 %v89
    %503 = vmatprep.subr.mxu0 0.0
    %504 = vmatpush1.msra.mxu0 %v88
    %505 = vmatprep.subr.mxu0 0.0
    %506 = vmatpush1.msra.mxu0 %v87
    %507 = vmatprep.subr.mxu0 0.0
    %508 = vmatpush1.msra.mxu0 %v86
    %509 = vmatprep.subr.mxu0 0.0
    %510 = vmatpush1.msra.mxu0 %v85
    %511 = vmatprep.subr.mxu0 0.0
    %512 = vmatpush2.msra.mxu0 0.0
    %513 = vmatprep.subr.mxu0 0.0
    %514 = vmatpush2.msra.mxu0 0.0
    %515 = vmatprep.subr.mxu0 0.0
    %516 = vmatpush2.msra.mxu0 0.0
    %517 = vmatprep.subr.mxu0 0.0
    %518 = vmatpush2.msra.mxu0 0.0
    %519 = vmatprep.subr.mxu0 0.0
    %520 = vmatpush2.msra.mxu0 0.0
    %521 = vmatprep.subr.mxu0 0.0
    %522 = vmatpush2.msra.mxu0 0.0
    %523 = vmatprep.subr.mxu0 0.0
    %524 = vmatpush2.msra.mxu0 0.0
    %525 = vmatprep.subr.mxu0 0.0
    %526 = vmatpush2.msra.mxu0 0.0
    %527 = vmatprep.subr.mxu0 0.0
    %528 = vmatpush2.msra.mxu0 0.0
    %529 = vmatprep.subr.mxu0 0.0
    %530 = vmatpush2.msra.mxu0 0.0
    %531 = vmatprep.subr.mxu0 0.0
    %532 = vmatpush2.msra.mxu0 0.0
    %533 = vmatprep.subr.mxu0 0.0
    %534 = vmatpush2.msra.mxu0 0.0
    %535 = vmatprep.subr.mxu0 0.0
    %536 = vmatpush2.msra.mxu0 0.0
    %537 = vmatprep.subr.mxu0 0.0
    %538 = vmatpush2.msra.mxu0 0.0
    %539 = vmatprep.subr.mxu0 0.0
    %540 = vmatpush2.msra.mxu0 0.0
    %541 = vmatprep.subr.mxu0 0.0
    %542 = vmatpush2.msra.mxu0 0.0
    %543 = vmatprep.mubr.f32.mxu0 0.0
    %544 = vmatmul.mubr.f32.gmra.mxu0 %v478
    %v545 = vpop.f32.mrf.mxu0
    %v546 = vadd.f32 0.0, %v545
    %v547 = vpop.f32.mrf.mxu0
    %548 = vdwg.mxu0
    %v550 = vrot.slane %v546, 6
    %v552 = vadd.f32 %v84, %v550
    %v553 = vtanh.pop %v552
    %v555 = vrot.slane %v553, 2
    %557 = vmatprep.subr.mxu0 0.0
    %558 = vmatpush1.msra.mxu0 %v100
    %559 = vmatprep.subr.mxu0 0.0
    %560 = vmatpush1.msra.mxu0 %v99
    %561 = vmatprep.subr.mxu0 0.0
    %562 = vmatpush1.msra.mxu0 %v98
    %563 = vmatprep.subr.mxu0 0.0
    %564 = vmatpush1.msra.mxu0 %v97
    %565 = vmatprep.subr.mxu0 0.0
    %566 = vmatpush1.msra.mxu0 %v96
    %567 = vmatprep.subr.mxu0 0.0
    %568 = vmatpush1.msra.mxu0 %v95
    %569 = vmatprep.subr.mxu0 0.0
    %570 = vmatpush1.msra.mxu0 %v94
    %571 = vmatprep.subr.mxu0 0.0
    %572 = vmatpush1.msra.mxu0 %v93
    %573 = vmatprep.subr.mxu0 0.0
    %574 = vmatpush1.msra.mxu0 %v92
    %575 = vmatprep.subr.mxu0 0.0
    %576 = vmatpush1.msra.mxu0 %v91
    %577 = vmatprep.subr.mxu0 0.0
    %578 = vmatpush1.msra.mxu0 %v90
    %579 = vmatprep.subr.mxu0 0.0
    %580 = vmatpush1.msra.mxu0 %v89
    %581 = vmatprep.subr.mxu0 0.0
    %582 = vmatpush1.msra.mxu0 %v88
    %583 = vmatprep.subr.mxu0 0.0
    %584 = vmatpush1.msra.mxu0 %v87
    %585 = vmatprep.subr.mxu0 0.0
    %586 = vmatpush1.msra.mxu0 %v86
    %587 = vmatprep.subr.mxu0 0.0
    %588 = vmatpush1.msra.mxu0 %v85
    %589 = vmatprep.subr.mxu0 0.0
    %590 = vmatpush2.msra.mxu0 0.0
    %591 = vmatprep.subr.mxu0 0.0
    %592 = vmatpush2.msra.mxu0 0.0
    %593 = vmatprep.subr.mxu0 0.0
    %594 = vmatpush2.msra.mxu0 0.0
    %595 = vmatprep.subr.mxu0 0.0
    %596 = vmatpush2.msra.mxu0 0.0
    %597 = vmatprep.subr.mxu0 0.0
    %598 = vmatpush2.msra.mxu0 0.0
    %599 = vmatprep.subr.mxu0 0.0
    %600 = vmatpush2.msra.mxu0 0.0
    %601 = vmatprep.subr.mxu0 0.0
    %602 = vmatpush2.msra.mxu0 0.0
    %603 = vmatprep.subr.mxu0 0.0
    %604 = vmatpush2.msra.mxu0 0.0
    %605 = vmatprep.subr.mxu0 0.0
    %606 = vmatpush2.msra.mxu0 0.0
    %607 = vmatprep.subr.mxu0 0.0
    %608 = vmatpush2.msra.mxu0 0.0
    %609 = vmatprep.subr.mxu0 0.0
    %610 = vmatpush2.msra.mxu0 0.0
    %611 = vmatprep.subr.mxu0 0.0
    %612 = vmatpush2.msra.mxu0 0.0
    %613 = vmatprep.subr.mxu0 0.0
    %614 = vmatpush2.msra.mxu0 0.0
    %615 = vmatprep.subr.mxu0 0.0
    %616 = vmatpush2.msra.mxu0 0.0
    %617 = vmatprep.subr.mxu0 0.0
    %618 = vmatpush2.msra.mxu0 0.0
    %619 = vmatprep.subr.mxu0 0.0
    %620 = vmatpush2.msra.mxu0 0.0
    %621 = vmatprep.mubr.f32.mxu0 0.0
    %622 = vmatmul.mubr.f32.gmra.mxu0 %v555
    %v623 = vpop.f32.mrf.mxu0
    %v624 = vadd.f32 0.0, %v623
    %v625 = vpop.f32.mrf.mxu0
    %626 = vdwg.mxu0
    %v628 = vrot.slane %v624, 4
    %v630 = vadd.f32 %v84, %v628
    %v631 = vtanh.pop %v630
    %v633 = vrot.slane %v631, 4
    %635 = vmatprep.subr.mxu0 0.0
    %636 = vmatpush1.msra.mxu0 %v100
    %637 = vmatprep.subr.mxu0 0.0
    %638 = vmatpush1.msra.mxu0 %v99
    %639 = vmatprep.subr.mxu0 0.0
    %640 = vmatpush1.msra.mxu0 %v98
    %641 = vmatprep.subr.mxu0 0.0
    %642 = vmatpush1.msra.mxu0 %v97
    %643 = vmatprep.subr.mxu0 0.0
    %644 = vmatpush1.msra.mxu0 %v96
    %645 = vmatprep.subr.mxu0 0.0
    %646 = vmatpush1.msra.mxu0 %v95
    %647 = vmatprep.subr.mxu0 0.0
    %648 = vmatpush1.msra.mxu0 %v94
    %649 = vmatprep.subr.mxu0 0.0
    %650 = vmatpush1.msra.mxu0 %v93
    %651 = vmatprep.subr.mxu0 0.0
    %652 = vmatpush1.msra.mxu0 %v92
    %653 = vmatprep.subr.mxu0 0.0
    %654 = vmatpush1.msra.mxu0 %v91
    %655 = vmatprep.subr.mxu0 0.0
    %656 = vmatpush1.msra.mxu0 %v90
    %657 = vmatprep.subr.mxu0 0.0
    %658 = vmatpush1.msra.mxu0 %v89
    %659 = vmatprep.subr.mxu0 0.0
    %660 = vmatpush1.msra.mxu0 %v88
    %661 = vmatprep.subr.mxu0 0.0
    %662 = vmatpush1.msra.mxu0 %v87
    %663 = vmatprep.subr.mxu0 0.0
    %664 = vmatpush1.msra.mxu0 %v86
    %665 = vmatprep.subr.mxu0 0.0
    %666 = vmatpush1.msra.mxu0 %v85
    %667 = vmatprep.subr.mxu0 0.0
    %668 = vmatpush2.msra.mxu0 0.0
    %669 = vmatprep.subr.mxu0 0.0
    %670 = vmatpush2.msra.mxu0 0.0
    %671 = vmatprep.subr.mxu0 0.0
    %672 = vmatpush2.msra.mxu0 0.0
    %673 = vmatprep.subr.mxu0 0.0
    %674 = vmatpush2.msra.mxu0 0.0
    %675 = vmatprep.subr.mxu0 0.0
    %676 = vmatpush2.msra.mxu0 0.0
    %677 = vmatprep.subr.mxu0 0.0
    %678 = vmatpush2.msra.mxu0 0.0
    %679 = vmatprep.subr.mxu0 0.0
    %680 = vmatpush2.msra.mxu0 0.0
    %681 = vmatprep.subr.mxu0 0.0
    %682 = vmatpush2.msra.mxu0 0.0
    %683 = vmatprep.subr.mxu0 0.0
    %684 = vmatpush2.msra.mxu0 0.0
    %685 = vmatprep.subr.mxu0 0.0
    %686 = vmatpush2.msra.mxu0 0.0
    %687 = vmatprep.subr.mxu0 0.0
    %688 = vmatpush2.msra.mxu0 0.0
    %689 = vmatprep.subr.mxu0 0.0
    %690 = vmatpush2.msra.mxu0 0.0
    %691 = vmatprep.subr.mxu0 0.0
    %692 = vmatpush2.msra.mxu0 0.0
    %693 = vmatprep.subr.mxu0 0.0
    %694 = vmatpush2.msra.mxu0 0.0
    %695 = vmatprep.subr.mxu0 0.0
    %696 = vmatpush2.msra.mxu0 0.0
    %697 = vmatprep.subr.mxu0 0.0
    %698 = vmatpush2.msra.mxu0 0.0
    %699 = vmatprep.mubr.f32.mxu0 0.0
    %700 = vmatmul.mubr.f32.gmra.mxu0 %v633
    %v701 = vpop.f32.mrf.mxu0
    %v702 = vadd.f32 0.0, %v701
    %v703 = vpop.f32.mrf.mxu0
    %704 = vdwg.mxu0
    %v706 = vrot.slane %v702, 2
    %v708 = vadd.f32 %v84, %v706
    %v709 = vtanh.pop %v708
    %v710 = vld [vmem:[#allocation2 + $0x84] sm:$0x1]
    %v711 = vlaneseq
    %v712 = vshrl.u32 %v711, 7
    %v713 = vsub.s32 0, %v712
    %v714 = vrot.slane %v710, %v713
    %v715 = vmul.f32 %v709, %v714
    %vm716 = vcmask 1047558
    %v717 = vsel %vm716, %v715, 0.0
    %718 = vadd.xlane.f32.xlu0 %v717
    %v719 = vpop.xlane.xlu0 %718
    %v720 = vld [vmem:[#allocation2 + $0x85] sm:$0x1]
    %v721 = vlaneseq
    %v722 = vshrl.u32 %v721, 7
    %v723 = vsub.s32 0, %v722
    %v724 = vrot.slane %v720, %v723
    %v725 = vadd.f32 %v719, %v724
    %vm726 = vcmask 7174
    %727 = vst.msk [vmem:[%s2 - $0x6] sm:$0xc0] %vm726, %v725
    // Predicated region
    $region14: #{rnn_controller_forward.1} parent=1 // pred_check
      _
    $region15: #{rnn_controller_forward.1} parent=1 // pred_check_branch
      %729 = sbr.rel (0) target = $region17
    $region16: #{rnn_controller_forward.1} parent=1 // pred_region
      _
    $region17: #{rnn_controller_forward.1} parent=1 // pred_fallthru
      _
    // Predicated region
    $region18: #{rnn_controller_forward.1} parent=1 // pred_check
      _
    $region19: #{rnn_controller_forward.1} parent=1 // pred_check_branch
      %731 = sbr.rel (0) target = $region21
    $region20: #{rnn_controller_forward.1} parent=1 // pred_region
      _
    $region21: #{rnn_controller_forward.1} parent=1 // pred_fallthru
      _
    %732 = vsyncpa [#allocation3], 1

</llo_original>
